<compile_context>
chip_gen: v7x
topology: tpu7x:2x2x1
jax: 0.10.0
libtpu: 0.0.40
codegen_flags: <defaults>
</compile_context>

<pallas_src>
import functools
import math

import jax
import jax.numpy as jnp
from jax.experimental import pallas as pl
from jax.experimental.pallas import tpu as pltpu

# Model hyper-parameters (from the PyTorch module).
D = 128          # dim (dim_Q = dim_K = dim_V)
H = 4            # num_heads
DH = D // H      # dim_split = 32
NUM_SEEDS = 1    # PMA num_seeds


def _pma_pool_kernel(x_ref, q_ref, wproj_ref, bproj_ref, wo_ref, bo_ref,
                     wl_ref, bl_ref, out_ref, *, n_valid):
    """One grid step == TB batch elements.  Full PMA + output Linear in-kernel."""
    TB, N, _ = x_ref.shape
    x2d = x_ref[...].reshape(TB * N, D)                                    # (TB*N, D)

    # Single fused MXU pass: lanes [0:D) are the V projection, lanes [D:2D) are the
    # lane-dense attention scores (seed query q and 1/sqrt(dim_V) already folded in).
    pv = jnp.dot(x2d, wproj_ref[...],
                 preferred_element_type=jnp.float32) + bproj_ref[...]      # (TB*N, 2D)
    v = pv[:, :D].reshape(TB, N, D)                                        # (TB, N, D)
    s = pv[:, D:].reshape(TB, N, D)                                        # lane d -> head d//DH

    if n_valid < N:  # static: only traced when the set dimension was padded
        pos = jax.lax.broadcasted_iota(jnp.int32, (TB, N, D), 1)
        s = jnp.where(pos < n_valid, s, -1e30)

    # Softmax over the set dimension N, per (batch element, lane); lanes belonging to
    # the same head carry identical columns, so this equals the per-head softmax.
    s = s - jnp.max(s, axis=1, keepdims=True)
    p = jnp.exp(s)                                                         # EUP
    den = jnp.sum(p, axis=1, keepdims=True)
    p = p * pl.reciprocal(den, approx=True)                                # EUP vrcp

    # Attention output + residual seed query (broadcast over the batch tile).
    o = q_ref[...] + jnp.sum(p * v, axis=1)                                # (TB, D)

    # O = O + relu(fc_o(O))   (bn=False path -> no BatchNorm layers)
    o = o + jnp.maximum(
        jnp.dot(o, wo_ref[...], preferred_element_type=jnp.float32) + bo_ref[...], 0.0)

    # Final Linear(128 -> out_pad) of the Sequential (lane-dense, padded output).
    out_ref[...] = jnp.dot(o, wl_ref[...],
                           preferred_element_type=jnp.float32) + bl_ref[...]


def _choose_tb(batch, n_pad, target_bytes=2 << 20, max_tb=1024):
    """Batch tile sized by a feature-byte budget (amortizes ~0.35us per grid step)."""
    per_elem = n_pad * D * 4                                # bytes of features / batch elem
    tb = max(8, min(max_tb, (target_bytes // per_elem) // 8 * 8))
    b8 = (batch + 7) // 8 * 8
    tb = min(tb, b8)
    if b8 >= 16:        # keep >= 2 grid steps so both v7x TensorCores get work
        tb = min(tb, ((b8 + 1) // 2 + 7) // 8 * 8)
    return int(tb)


def embedding_pooling_pallas(features, params):
    """features: (B, N, D) float32.  Returns PyTorch-equivalent `output.squeeze()`."""
    B, N, _ = features.shape
    out_dim = params["wl"].shape[1]

    # Pad the set dimension to a sublane multiple so (TB,N,D)<->(TB*N,D) reshapes are
    # layout-trivial; padded positions are masked with -inf scores inside the kernel.
    N_pad = max(8, (N + 7) // 8 * 8)
    if N_pad != N:
        features = jnp.pad(features, ((0, 0), (0, N_pad - N), (0, 0)))

    TB = _choose_tb(B, N_pad)
    B_pad = ((B + TB - 1) // TB) * TB
    if B_pad != B:
        features = jnp.pad(features, ((0, B_pad - B), (0, 0), (0, 0)))

    # Hoist the batch-invariant seed projection out of the kernel.
    q = params["S"] @ params["wq"] + params["bq"]                          # (1, D)

    # Fold q and the 1/sqrt(dim_V) scale into the key path, then expand the (D, H)
    # head weights to a lane-dense (D, D) matrix: column d belongs to head d // DH.
    scale = 1.0 / math.sqrt(D)
    wkq = ((params["wk"] * q[0][None, :]).reshape(D, H, DH).sum(axis=2)) * scale  # (D, H)
    bkq = ((params["bk"][0] * q[0]).reshape(H, DH).sum(axis=1)) * scale           # (H,)
    head_of_lane = jnp.arange(D) // DH
    wkq_full = wkq[:, head_of_lane]                                        # (D, D)
    bkq_full = bkq[head_of_lane][None, :]                                  # (1, D)

    # Single 256-lane projection RHS: [V | scores] -> one MXU pass on v6e/v7x.
    wproj = jnp.concatenate([params["wv"], wkq_full], axis=1)              # (D, 2D)
    bproj = jnp.concatenate([params["bv"], bkq_full], axis=1)              # (1, 2D)

    # Lane-dense output: pad the final Linear to a multiple of 128 output lanes.
    out_pad = ((out_dim + 127) // 128) * 128
    wl_p = jnp.pad(params["wl"], ((0, 0), (0, out_pad - out_dim)))
    bl_p = jnp.pad(params["bl"], ((0, 0), (0, out_pad - out_dim)))

    full = lambda shape: pl.BlockSpec(shape, lambda b: tuple(0 for _ in shape))
    kernel = functools.partial(_pma_pool_kernel, n_valid=N)

    out = pl.pallas_call(
        kernel,
        out_shape=jax.ShapeDtypeStruct((B_pad, out_pad), jnp.float32),
        grid_spec=pltpu.PrefetchScalarGridSpec(
            num_scalar_prefetch=0,
            grid=(B_pad // TB,),
            in_specs=[
                pl.BlockSpec((TB, N_pad, D), lambda b: (b, 0, 0)),   # features tile
                full((1, D)),                                         # q = S @ Wq + bq
                full((D, 2 * D)), full((1, 2 * D)),                   # fused [V | scores]
                full((D, D)), full((1, D)),                           # fc_o
                full((D, out_pad)), full((1, out_pad)),               # final Linear (padded)
            ],
            out_specs=pl.BlockSpec((TB, out_pad), lambda b: (b, 0)),
        ),
        compiler_params=pltpu.CompilerParams(
            dimension_semantics=("parallel",),
            vmem_limit_bytes=32 * 1024 * 1024),   # v5e scoped default is only 16 MiB
    )(features, q, wproj, bproj, params["wo"], params["bo"], wl_p, bl_p)

    # TODO(synk): if the upstream producer emits bf16 features, also cast wproj/wo/wl
    # to bf16 (keep f32 accumulation + softmax) to halve HBM traffic on v6e/v7x.
    return jnp.squeeze(out[:B, :out_dim])


def embedding_pooling_ref(features, params):
    """Pure-JAX reference reproducing the PyTorch forward exactly."""
    B = features.shape[0]
    S = jnp.broadcast_to(params["S"][None], (B, NUM_SEEDS, D))              # S.repeat(B,1,1)
    Q = S @ params["wq"] + params["bq"]                                     # (B, 1, D)
    K = features @ params["wk"] + params["bk"]                              # (B, N, D)
    V = features @ params["wv"] + params["bv"]                              # (B, N, D)

    def split_heads(t):   # cat(split(dim_split, 2), 0) -> (H*B, ., DH)
        return jnp.concatenate(jnp.split(t, H, axis=2), axis=0)

    Q_, K_, V_ = split_heads(Q), split_heads(K), split_heads(V)
    A = jax.nn.softmax(jnp.einsum("bqd,bkd->bqk", Q_, K_) / math.sqrt(D), axis=2)
    O = Q_ + jnp.einsum("bqk,bkd->bqd", A, V_)
    O = jnp.concatenate(jnp.split(O, H, axis=0), axis=2)                    # (B, 1, D)
    O = O + jax.nn.relu(O @ params["wo"] + params["bo"])
    out = O @ params["wl"] + params["bl"]                                   # (B, 1, out_dim)
    return jnp.squeeze(out)


def init_params(key, out_dim):
    """Deterministic synthetic parameters (shapes match the nn.Module __init__)."""
    ks = jax.random.split(key, 11)

    def lin(kw, fan_in, fan_out):
        bound = 1.0 / math.sqrt(fan_in)
        w = jax.random.uniform(kw, (fan_in, fan_out), jnp.float32, -bound, bound)
        b = jax.random.uniform(jax.random.fold_in(kw, 1), (1, fan_out), jnp.float32,
                               -bound, bound)
        return w, b

    # PMA seed S: xavier_uniform on shape (1, num_seeds, dim) -> stored as (num_seeds, dim)
    gain = math.sqrt(6.0 / (NUM_SEEDS + D))
    S = jax.random.uniform(ks[0], (NUM_SEEDS, D), jnp.float32, -gain, gain)
    wq, bq = lin(ks[1], D, D)
    wk, bk = lin(ks[2], D, D)
    wv, bv = lin(ks[3], D, D)
    wo, bo = lin(ks[4], D, D)
    wl, bl = lin(ks[5], D, out_dim)
    return dict(S=S, wq=wq, bq=bq, wk=wk, bk=bk, wv=wv, bv=bv,
                wo=wo, bo=bo, wl=wl, bl=bl)


if __name__ == "__main__":
    B, N, out_dim = 2, 8, 32
    key = jax.random.PRNGKey(0)
    k_feat, k_par = jax.random.split(key)
    features = jax.random.normal(k_feat, (B, N, D), dtype=jnp.float32)
    params = init_params(k_par, out_dim)

    out = embedding_pooling_pallas(features, params)
    out = jax.block_until_ready(out)

    ref = embedding_pooling_ref(features, params)
    assert out.shape == ref.shape, (out.shape, ref.shape)
    # Slightly looser than before: approx reciprocal in the softmax denominator.
    assert jnp.allclose(out, ref, atol=1e-3, rtol=1e-3), float(jnp.max(jnp.abs(out - ref)))
    print("KERNEL_OK")
</pallas_src>

<mosaic_0001>
module attributes {stable_mosaic.version = 11 : i64} {
  func.func @_pma_pool_kernel(%arg0: i32, %arg1: memref<8x8x128xf32, #tpu.memory_space<vmem>>, %arg2: memref<1x128xf32, #tpu.memory_space<vmem>>, %arg3: memref<128x256xf32, #tpu.memory_space<vmem>>, %arg4: memref<1x256xf32, #tpu.memory_space<vmem>>, %arg5: memref<128x128xf32, #tpu.memory_space<vmem>>, %arg6: memref<1x128xf32, #tpu.memory_space<vmem>>, %arg7: memref<128x128xf32, #tpu.memory_space<vmem>>, %arg8: memref<1x128xf32, #tpu.memory_space<vmem>>, %arg9: memref<8x128xf32, #tpu.memory_space<vmem>>) attributes {dimension_semantics = [#tpu.dimension_semantics<parallel>], iteration_bounds = array<i64: 1>, scalar_prefetch = 0 : i64, scratch_operands = 0 : i64, tpu.core_type = #tpu.core_type<tc>, window_params = [{transform_indices = @transform_0, window_bounds = array<i64: 8, 8, 128>}, {pipeline_mode = #tpu.pipeline_mode<synchronous>, transform_indices = @transform_1, window_bounds = array<i64: 1, 128>}, {pipeline_mode = #tpu.pipeline_mode<synchronous>, transform_indices = @transform_2, window_bounds = array<i64: 128, 256>}, {pipeline_mode = #tpu.pipeline_mode<synchronous>, transform_indices = @transform_3, window_bounds = array<i64: 1, 256>}, {pipeline_mode = #tpu.pipeline_mode<synchronous>, transform_indices = @transform_4, window_bounds = array<i64: 128, 128>}, {pipeline_mode = #tpu.pipeline_mode<synchronous>, transform_indices = @transform_5, window_bounds = array<i64: 1, 128>}, {pipeline_mode = #tpu.pipeline_mode<synchronous>, transform_indices = @transform_6, window_bounds = array<i64: 128, 128>}, {pipeline_mode = #tpu.pipeline_mode<synchronous>, transform_indices = @transform_7, window_bounds = array<i64: 1, 128>}, {transform_indices = @transform_8, window_bounds = array<i64: 8, 128>}]} {
    %c0 = arith.constant 0 : index
    %c0_0 = arith.constant 0 : index
    %c0_1 = arith.constant 0 : index
    %0 = vector.load %arg1[%c0, %c0_0, %c0_1] : memref<8x8x128xf32, #tpu.memory_space<vmem>>, vector<8x8x128xf32>
    %1 = vector.shape_cast %0 : vector<8x8x128xf32> to vector<64x128xf32>
    %c0_2 = arith.constant 0 : index
    %c0_3 = arith.constant 0 : index
    %2 = vector.load %arg3[%c0_2, %c0_3] : memref<128x256xf32, #tpu.memory_space<vmem>>, vector<128x256xf32>
    %cst = arith.constant dense<0.000000e+00> : vector<64x256xf32>
    %3 = tpu.matmul %1, %2, %cst {dimension_numbers = #tpu.dot_dimension_numbers<[1], [0], [0], [1], [0, 0, 1, 1], [], []>} : vector<64x128xf32>, vector<128x256xf32>, vector<64x256xf32> -> vector<64x256xf32>
    %c0_4 = arith.constant 0 : index
    %c0_5 = arith.constant 0 : index
    %4 = vector.load %arg4[%c0_4, %c0_5] : memref<1x256xf32, #tpu.memory_space<vmem>>, vector<1x256xf32>
    %5 = vector.broadcast %4 : vector<1x256xf32> to vector<64x256xf32>
    %6 = arith.addf %3, %5 : vector<64x256xf32>
    %7 = vector.extract_strided_slice %6 {offsets = [0, 0], sizes = [64, 128], strides = [1, 1]} : vector<64x256xf32> to vector<64x128xf32>
    %8 = vector.shape_cast %7 : vector<64x128xf32> to vector<8x8x128xf32>
    %9 = vector.extract_strided_slice %6 {offsets = [0, 128], sizes = [64, 128], strides = [1, 1]} : vector<64x256xf32> to vector<64x128xf32>
    %10 = vector.shape_cast %9 : vector<64x128xf32> to vector<8x8x128xf32>
    %cst_6 = arith.constant dense<0xFF800000> : vector<8x128xf32>
    %11 = vector.multi_reduction <maximumf>, %10, %cst_6 [1] : vector<8x8x128xf32> to vector<8x128xf32>
    %12 = vector.shape_cast %11 : vector<8x128xf32> to vector<8x1x128xf32>
    %13 = vector.broadcast %12 : vector<8x1x128xf32> to vector<8x8x128xf32>
    %14 = arith.subf %10, %13 : vector<8x8x128xf32>
    %15 = math.exp %14 : vector<8x8x128xf32>
    %cst_7 = arith.constant dense<0.000000e+00> : vector<8x128xf32>
    %16 = vector.multi_reduction <add>, %15, %cst_7 [1] : vector<8x8x128xf32> to vector<8x128xf32>
    %17 = vector.shape_cast %16 : vector<8x128xf32> to vector<8x1x128xf32>
    %18 = tpu.reciprocal %17 {approx = true} : vector<8x1x128xf32> -> vector<8x1x128xf32>
    %19 = vector.broadcast %18 : vector<8x1x128xf32> to vector<8x8x128xf32>
    %20 = arith.mulf %15, %19 : vector<8x8x128xf32>
    %c0_8 = arith.constant 0 : index
    %c0_9 = arith.constant 0 : index
    %21 = vector.load %arg2[%c0_8, %c0_9] : memref<1x128xf32, #tpu.memory_space<vmem>>, vector<1x128xf32>
    %22 = arith.mulf %20, %8 : vector<8x8x128xf32>
    %cst_10 = arith.constant dense<0.000000e+00> : vector<8x128xf32>
    %23 = vector.multi_reduction <add>, %22, %cst_10 [1] : vector<8x8x128xf32> to vector<8x128xf32>
    %24 = vector.broadcast %21 : vector<1x128xf32> to vector<8x128xf32>
    %25 = arith.addf %24, %23 : vector<8x128xf32>
    %c0_11 = arith.constant 0 : index
    %c0_12 = arith.constant 0 : index
    %26 = vector.load %arg5[%c0_11, %c0_12] : memref<128x128xf32, #tpu.memory_space<vmem>>, vector<128x128xf32>
    %cst_13 = arith.constant dense<0.000000e+00> : vector<8x128xf32>
    %27 = tpu.matmul %25, %26, %cst_13 {dimension_numbers = #tpu.dot_dimension_numbers<[1], [0], [0], [1], [0, 0, 1, 1], [], []>} : vector<8x128xf32>, vector<128x128xf32>, vector<8x128xf32> -> vector<8x128xf32>
    %c0_14 = arith.constant 0 : index
    %c0_15 = arith.constant 0 : index
    %28 = vector.load %arg6[%c0_14, %c0_15] : memref<1x128xf32, #tpu.memory_space<vmem>>, vector<1x128xf32>
    %29 = vector.broadcast %28 : vector<1x128xf32> to vector<8x128xf32>
    %30 = arith.addf %27, %29 : vector<8x128xf32>
    %cst_16 = arith.constant 0.000000e+00 : f32
    %31 = vector.broadcast %cst_16 : f32 to vector<8x128xf32>
    %32 = arith.maximumf %30, %31 : vector<8x128xf32>
    %33 = arith.addf %25, %32 : vector<8x128xf32>
    %c0_17 = arith.constant 0 : index
    %c0_18 = arith.constant 0 : index
    %34 = vector.load %arg7[%c0_17, %c0_18] : memref<128x128xf32, #tpu.memory_space<vmem>>, vector<128x128xf32>
    %cst_19 = arith.constant dense<0.000000e+00> : vector<8x128xf32>
    %35 = tpu.matmul %33, %34, %cst_19 {dimension_numbers = #tpu.dot_dimension_numbers<[1], [0], [0], [1], [0, 0, 1, 1], [], []>} : vector<8x128xf32>, vector<128x128xf32>, vector<8x128xf32> -> vector<8x128xf32>
    %c0_20 = arith.constant 0 : index
    %c0_21 = arith.constant 0 : index
    %36 = vector.load %arg8[%c0_20, %c0_21] : memref<1x128xf32, #tpu.memory_space<vmem>>, vector<1x128xf32>
    %37 = vector.broadcast %36 : vector<1x128xf32> to vector<8x128xf32>
    %38 = arith.addf %35, %37 : vector<8x128xf32>
    %c0_22 = arith.constant 0 : index
    %c0_23 = arith.constant 0 : index
    %39 = vector.load %arg9[%c0_22, %c0_23] : memref<8x128xf32, #tpu.memory_space<vmem>>, vector<8x128xf32>
    tpu.vector_store %arg9[%c0_22, %c0_23], %38 {strides = array<i32>} : memref<8x128xf32, #tpu.memory_space<vmem>>, vector<8x128xf32>,
    return
  }
  func.func @transform_0(%arg0: i32) -> (i32, i32, i32) {
    %c0_i32 = arith.constant 0 : i32
    %c0_i32_0 = arith.constant 0 : i32
    %c0_i32_1 = arith.constant 0 : i32
    return %arg0, %c0_i32, %c0_i32_0 : i32, i32, i32
  }
  func.func @transform_1(%arg0: i32) -> (i32, i32) {
    %c0_i32 = arith.constant 0 : i32
    %c0_i32_0 = arith.constant 0 : i32
    %c0_i32_1 = arith.constant 0 : i32
    return %c0_i32, %c0_i32_0 : i32, i32
  }
  func.func @transform_2(%arg0: i32) -> (i32, i32) {
    %c0_i32 = arith.constant 0 : i32
    %c0_i32_0 = arith.constant 0 : i32
    %c0_i32_1 = arith.constant 0 : i32
    return %c0_i32, %c0_i32_0 : i32, i32
  }
  func.func @transform_3(%arg0: i32) -> (i32, i32) {
    %c0_i32 = arith.constant 0 : i32
    %c0_i32_0 = arith.constant 0 : i32
    %c0_i32_1 = arith.constant 0 : i32
    return %c0_i32, %c0_i32_0 : i32, i32
  }
  func.func @transform_4(%arg0: i32) -> (i32, i32) {
    %c0_i32 = arith.constant 0 : i32
    %c0_i32_0 = arith.constant 0 : i32
    %c0_i32_1 = arith.constant 0 : i32
    return %c0_i32, %c0_i32_0 : i32, i32
  }
  func.func @transform_5(%arg0: i32) -> (i32, i32) {
    %c0_i32 = arith.constant 0 : i32
    %c0_i32_0 = arith.constant 0 : i32
    %c0_i32_1 = arith.constant 0 : i32
    return %c0_i32, %c0_i32_0 : i32, i32
  }
  func.func @transform_6(%arg0: i32) -> (i32, i32) {
    %c0_i32 = arith.constant 0 : i32
    %c0_i32_0 = arith.constant 0 : i32
    %c0_i32_1 = arith.constant 0 : i32
    return %c0_i32, %c0_i32_0 : i32, i32
  }
  func.func @transform_7(%arg0: i32) -> (i32, i32) {
    %c0_i32 = arith.constant 0 : i32
    %c0_i32_0 = arith.constant 0 : i32
    %c0_i32_1 = arith.constant 0 : i32
    return %c0_i32, %c0_i32_0 : i32, i32
  }
  func.func @transform_8(%arg0: i32) -> (i32, i32) {
    %c0_i32 = arith.constant 0 : i32
    %c0_i32_0 = arith.constant 0 : i32
    return %arg0, %c0_i32 : i32, i32
  }
}

</mosaic_0001>

<llo_original>
// kernel: tpu_custom_call.1
$region0: #{tpu_custom_call.1}
  #allocation0 [shape = 'u32[]', space=smem, size = 0x4, offset = 0x4, fixed_abs, tag = 'smem constant byte address 0x4 - core index']
  #allocation1 [shape = 'u32[144,128]{1,0:T(1,128)}', space=vmem, size = 0x12000, scoped, tag = 'internal scratch']
  %s0 = inlined_call_operand.hbm [shape: f32[8,8,128], index: 0, kind: input, shape index: {}]
  %s1 = inlined_call_operand.vmem [shape: f32[1,128], index: 1, kind: input, shape index: {}]
  %s2 = inlined_call_operand.hbm [shape: f32[128,256], index: 2, kind: input, shape index: {}]
  %s3 = inlined_call_operand.vmem [shape: f32[1,256], index: 3, kind: input, shape index: {}]
  %s4 = inlined_call_operand.hbm [shape: f32[128,128], index: 4, kind: input, shape index: {}]
  %s5 = inlined_call_operand.vmem [shape: f32[1,128], index: 5, kind: input, shape index: {}]
  %s6 = inlined_call_operand.hbm [shape: f32[128,128], index: 6, kind: input, shape index: {}]
  %s7 = inlined_call_operand.vmem [shape: f32[1,128], index: 7, kind: input, shape index: {}]
  %s8 = inlined_call_operand.hbm [shape: f32[8,128], index: 8, kind: output, shape index: {}]
  %s9 = sld [smem:[#allocation0]]
  $region58: #{tpu_custom_call.1} parent=0
    _
  %s11 = ssub.s32 1, %s9
  %s12 = scalar_select 0, %s11, %s9
  $region1: #{tpu_custom_call.1} parent=0
    #allocation2 [shape = 'u8[32768]{0}', space=vmem, size = 0x8000, scoped, tag = 'input window, operand 0, single buffered']
    #allocation3 [shape = 's32[1]{0}', space=sflag, size = 0x4, scoped, tag = 'scoped memory for tpu_custom_call.1']
    #allocation4 [shape = 's32[1]{0}', space=sflag, size = 0x4, scoped, tag = 'scoped memory for tpu_custom_call.1']
    #allocation5 [shape = 'u8[131072]{0}', space=vmem, size = 0x20000, scoped, tag = 'input window, operand 2, single buffered']
    #allocation6 [shape = 's32[1]{0}', space=sflag, size = 0x4, scoped, tag = 'scoped memory for tpu_custom_call.1']
    #allocation7 [shape = 'u8[65536]{0}', space=vmem, size = 0x10000, scoped, tag = 'input window, operand 4, single buffered']
    #allocation8 [shape = 'u8[65536]{0}', space=vmem, size = 0x10000, scoped, tag = 'input window, operand 6, single buffered']
    #allocation9 [shape = 's32[1]{0}', space=sflag, size = 0x4, scoped, tag = 'scoped memory for tpu_custom_call.1']
    #allocation10 [shape = 'u8[4096]{0}', space=vmem, size = 0x1000, scoped, tag = 'output window, operand 0, single buffered']
    %13 = vsyncpa [#allocation3], 0
    %14 = vsyncpa [#allocation6], 0
    %15 = vsyncpa [#allocation9], 0
    %16 = vsyncpa [#allocation4], 0
    // Predicated region
    $region2: #{tpu_custom_call.1} parent=1 // pred_check
      _
    $region3: #{tpu_custom_call.1} parent=1 // pred_check_branch
      %18 = sbr.rel (0) target = $region5
    $region4: #{tpu_custom_call.1} parent=1 // pred_region
      %s20 = ssub.s32 1024, 1024
      %21 = vsyncadd [#allocation3], %s20
      %s22 = sshll.u32 [#allocation2], 4
      %s23 = int_to_ptr.vmem [resolvable:$true] %s22
      %28 = dma.hbm_to_vmem [thread:$0]  %s0, 1024, %s23, [#allocation3], 128, 128, 8
    $region5: #{tpu_custom_call.1} parent=1 // pred_fallthru
      _
    // Predicated region
    $region6: #{tpu_custom_call.1} parent=1 // pred_check
      _
    $region7: #{tpu_custom_call.1} parent=1 // pred_check_branch
      %30 = sbr.rel (0) target = $region9
    $region8: #{tpu_custom_call.1} parent=1 // pred_region
      _
    $region9: #{tpu_custom_call.1} parent=1 // pred_fallthru
      _
    // Predicated region
    $region10: #{tpu_custom_call.1} parent=1 // pred_check
      _
    $region11: #{tpu_custom_call.1} parent=1 // pred_check_branch
      %32 = sbr.rel (0) target = $region13
    $region12: #{tpu_custom_call.1} parent=1 // pred_region
      %s34 = ssub.s32 4096, 4096
      %35 = vsyncadd [#allocation6], %s34
      %s36 = sshll.u32 [#allocation5], 4
      %s37 = int_to_ptr.vmem [resolvable:$true] %s36
      %42 = dma.hbm_to_vmem [thread:$0]  %s2, 4096, %s37, [#allocation6], 256, 256, 16
    $region13: #{tpu_custom_call.1} parent=1 // pred_fallthru
      _
    // Predicated region
    $region14: #{tpu_custom_call.1} parent=1 // pred_check
      _
    $region15: #{tpu_custom_call.1} parent=1 // pred_check_branch
      %44 = sbr.rel (0) target = $region17
    $region16: #{tpu_custom_call.1} parent=1 // pred_region
      _
    $region17: #{tpu_custom_call.1} parent=1 // pred_fallthru
      _
    // Predicated region
    $region18: #{tpu_custom_call.1} parent=1 // pred_check
      _
    $region19: #{tpu_custom_call.1} parent=1 // pred_check_branch
      %46 = sbr.rel (0) target = $region21
    $region20: #{tpu_custom_call.1} parent=1 // pred_region
      %s48 = ssub.s32 2048, 2048
      %49 = vsyncadd [#allocation6], %s48
      %s50 = sshll.u32 [#allocation7], 4
      %s51 = int_to_ptr.vmem [resolvable:$true] %s50
      %56 = dma.hbm_to_vmem [thread:$0]  %s4, 2048, %s51, [#allocation6], 128, 128, 8
    $region21: #{tpu_custom_call.1} parent=1 // pred_fallthru
      _
    // Predicated region
    $region22: #{tpu_custom_call.1} parent=1 // pred_check
      _
    $region23: #{tpu_custom_call.1} parent=1 // pred_check_branch
      %58 = sbr.rel (0) target = $region25
    $region24: #{tpu_custom_call.1} parent=1 // pred_region
      _
    $region25: #{tpu_custom_call.1} parent=1 // pred_fallthru
      _
    // Predicated region
    $region26: #{tpu_custom_call.1} parent=1 // pred_check
      _
    $region27: #{tpu_custom_call.1} parent=1 // pred_check_branch
      %60 = sbr.rel (0) target = $region29
    $region28: #{tpu_custom_call.1} parent=1 // pred_region
      %s62 = ssub.s32 2048, 2048
      %63 = vsyncadd [#allocation9], %s62
      %s64 = sshll.u32 [#allocation8], 4
      %s65 = int_to_ptr.vmem [resolvable:$true] %s64
      %70 = dma.hbm_to_vmem [thread:$0]  %s6, 2048, %s65, [#allocation9], 128, 128, 8
    $region29: #{tpu_custom_call.1} parent=1 // pred_fallthru
      _
    // Predicated region
    $region30: #{tpu_custom_call.1} parent=1 // pred_check
      _
    $region31: #{tpu_custom_call.1} parent=1 // pred_check_branch
      %72 = sbr.rel (0) target = $region33
    $region32: #{tpu_custom_call.1} parent=1 // pred_region
      _
    $region33: #{tpu_custom_call.1} parent=1 // pred_fallthru
      _
    // Predicated region
    $region34: #{tpu_custom_call.1} parent=1 // pred_check
      _
    $region35: #{tpu_custom_call.1} parent=1 // pred_check_branch
      %74 = sbr.rel (0) target = $region37
    $region36: #{tpu_custom_call.1} parent=1 // pred_region
      %75 = dma.done [#allocation3], 1024
    $region37: #{tpu_custom_call.1} parent=1 // pred_fallthru
      _
    // Predicated region
    $region38: #{tpu_custom_call.1} parent=1 // pred_check
      _
    $region39: #{tpu_custom_call.1} parent=1 // pred_check_branch
      %77 = sbr.rel (0) target = $region41
    $region40: #{tpu_custom_call.1} parent=1 // pred_region
      %78 = dma.done [#allocation6], 4096
    $region41: #{tpu_custom_call.1} parent=1 // pred_fallthru
      _
    // Predicated region
    $region42: #{tpu_custom_call.1} parent=1 // pred_check
      _
    $region43: #{tpu_custom_call.1} parent=1 // pred_check_branch
      %80 = sbr.rel (0) target = $region45
    $region44: #{tpu_custom_call.1} parent=1 // pred_region
      %81 = dma.done [#allocation6], 2048
    $region45: #{tpu_custom_call.1} parent=1 // pred_fallthru
      _
    // Predicated region
    $region46: #{tpu_custom_call.1} parent=1 // pred_check
      _
    $region47: #{tpu_custom_call.1} parent=1 // pred_check_branch
      %83 = sbr.rel (0) target = $region49
    $region48: #{tpu_custom_call.1} parent=1 // pred_region
      %84 = dma.done [#allocation9], 2048
    $region49: #{tpu_custom_call.1} parent=1 // pred_fallthru
      _
    %v85 = vld [vmem:[#allocation2] sm:$0xff]
    %v86 = vld [vmem:[#allocation2 + $0x8] sm:$0xff]
    %v87 = vld [vmem:[#allocation2 + $0x10] sm:$0xff]
    %v88 = vld [vmem:[#allocation2 + $0x18] sm:$0xff]
    %v89 = vld [vmem:[#allocation2 + $0x20] sm:$0xff]
    %v90 = vld [vmem:[#allocation2 + $0x28] sm:$0xff]
    %v91 = vld [vmem:[#allocation2 + $0x30] sm:$0xff]
    %v92 = vld [vmem:[#allocation2 + $0x38] sm:$0xff]
    %v93 = vld [vmem:[#allocation5] sm:$0xff]
    %v94 = vld [vmem:[#allocation5 + $0x8] sm:$0xff]
    %v95 = vld [vmem:[#allocation5 + $0x10] sm:$0xff]
    %v96 = vld [vmem:[#allocation5 + $0x18] sm:$0xff]
    %v97 = vld [vmem:[#allocation5 + $0x20] sm:$0xff]
    %v98 = vld [vmem:[#allocation5 + $0x28] sm:$0xff]
    %v99 = vld [vmem:[#allocation5 + $0x30] sm:$0xff]
    %v100 = vld [vmem:[#allocation5 + $0x38] sm:$0xff]
    %v101 = vld [vmem:[#allocation5 + $0x40] sm:$0xff]
    %v102 = vld [vmem:[#allocation5 + $0x48] sm:$0xff]
    %v103 = vld [vmem:[#allocation5 + $0x50] sm:$0xff]
    %v104 = vld [vmem:[#allocation5 + $0x58] sm:$0xff]
    %v105 = vld [vmem:[#allocation5 + $0x60] sm:$0xff]
    %v106 = vld [vmem:[#allocation5 + $0x68] sm:$0xff]
    %v107 = vld [vmem:[#allocation5 + $0x70] sm:$0xff]
    %v108 = vld [vmem:[#allocation5 + $0x78] sm:$0xff]
    %v109 = vld [vmem:[#allocation5 + $0x80] sm:$0xff]
    %v110 = vld [vmem:[#allocation5 + $0x88] sm:$0xff]
    %v111 = vld [vmem:[#allocation5 + $0x90] sm:$0xff]
    %v112 = vld [vmem:[#allocation5 + $0x98] sm:$0xff]
    %v113 = vld [vmem:[#allocation5 + $0xa0] sm:$0xff]
    %v114 = vld [vmem:[#allocation5 + $0xa8] sm:$0xff]
    %v115 = vld [vmem:[#allocation5 + $0xb0] sm:$0xff]
    %v116 = vld [vmem:[#allocation5 + $0xb8] sm:$0xff]
    %v117 = vld [vmem:[#allocation5 + $0xc0] sm:$0xff]
    %v118 = vld [vmem:[#allocation5 + $0xc8] sm:$0xff]
    %v119 = vld [vmem:[#allocation5 + $0xd0] sm:$0xff]
    %v120 = vld [vmem:[#allocation5 + $0xd8] sm:$0xff]
    %v121 = vld [vmem:[#allocation5 + $0xe0] sm:$0xff]
    %v122 = vld [vmem:[#allocation5 + $0xe8] sm:$0xff]
    %v123 = vld [vmem:[#allocation5 + $0xf0] sm:$0xff]
    %v124 = vld [vmem:[#allocation5 + $0xf8] sm:$0xff]
    %v125 = vld [vmem:[%s3] sm:$0x3]
    %v127 = vlaneseq
    %v128 = vshrl.u32 %v127, 7
    %v129 = vsub.s32 0, %v128
    %v130 = vrot.slane %v125, %v129
    %v131 = vlaneseq
    %v132 = vshrl.u32 %v131, 7
    %v133 = vsub.s32 1, %v132
    %v134 = vrot.slane %v125, %v133
    %137 = vmatprep.subr.mxu0 %v94
    %138 = vmatpush1.msra.mxu0 %v93
    %139 = vmatprep.subr.mxu0 %v96
    %140 = vmatpush1.msra.mxu0 %v95
    %141 = vmatprep.subr.mxu0 %v98
    %142 = vmatpush1.msra.mxu0 %v97
    %143 = vmatprep.subr.mxu0 %v100
    %144 = vmatpush1.msra.mxu0 %v99
    %145 = vmatprep.subr.mxu0 %v102
    %146 = vmatpush1.msra.mxu0 %v101
    %147 = vmatprep.subr.mxu0 %v104
    %148 = vmatpush1.msra.mxu0 %v103
    %149 = vmatprep.subr.mxu0 %v106
    %150 = vmatpush1.msra.mxu0 %v105
    %151 = vmatprep.subr.mxu0 %v108
    %152 = vmatpush1.msra.mxu0 %v107
    %153 = vmatprep.subr.mxu0 %v110
    %154 = vmatpush1.msra.mxu0 %v109
    %155 = vmatprep.subr.mxu0 %v112
    %156 = vmatpush1.msra.mxu0 %v111
    %157 = vmatprep.subr.mxu0 %v114
    %158 = vmatpush1.msra.mxu0 %v113
    %159 = vmatprep.subr.mxu0 %v116
    %160 = vmatpush1.msra.mxu0 %v115
    %161 = vmatprep.subr.mxu0 %v118
    %162 = vmatpush1.msra.mxu0 %v117
    %163 = vmatprep.subr.mxu0 %v120
    %164 = vmatpush1.msra.mxu0 %v119
    %165 = vmatprep.subr.mxu0 %v122
    %166 = vmatpush1.msra.mxu0 %v121
    %167 = vmatprep.subr.mxu0 %v124
    %168 = vmatpush1.msra.mxu0 %v123
    %169 = vmatprep.subr.mxu0 0.0
    %170 = vmatpush1.msra.mxu0 0.0
    %171 = vmatprep.subr.mxu0 0.0
    %172 = vmatpush1.msra.mxu0 0.0
    %173 = vmatprep.subr.mxu0 0.0
    %174 = vmatpush1.msra.mxu0 0.0
    %175 = vmatprep.subr.mxu0 0.0
    %176 = vmatpush1.msra.mxu0 0.0
    %177 = vmatprep.subr.mxu0 0.0
    %178 = vmatpush1.msra.mxu0 0.0
    %179 = vmatprep.subr.mxu0 0.0
    %180 = vmatpush1.msra.mxu0 0.0
    %181 = vmatprep.subr.mxu0 0.0
    %182 = vmatpush1.msra.mxu0 0.0
    %183 = vmatprep.subr.mxu0 0.0
    %184 = vmatpush1.msra.mxu0 0.0
    %185 = vmatprep.subr.mxu0 0.0
    %186 = vmatpush1.msra.mxu0 0.0
    %187 = vmatprep.subr.mxu0 0.0
    %188 = vmatpush1.msra.mxu0 0.0
    %189 = vmatprep.subr.mxu0 0.0
    %190 = vmatpush1.msra.mxu0 0.0
    %191 = vmatprep.subr.mxu0 0.0
    %192 = vmatpush1.msra.mxu0 0.0
    %193 = vmatprep.subr.mxu0 0.0
    %194 = vmatpush1.msra.mxu0 0.0
    %195 = vmatprep.subr.mxu0 0.0
    %196 = vmatpush1.msra.mxu0 0.0
    %197 = vmatprep.subr.mxu0 0.0
    %198 = vmatpush1.msra.mxu0 0.0
    %199 = vmatprep.subr.mxu0 0.0
    %200 = vmatpush1.msra.mxu0 0.0
    %201 = vmatprep.mubr.f32.mxu0 0.0
    %202 = vmatmul.mubr.f32.gmra.mrb[0].mxu0 %v85
    %v203 = vpop.f32.mrb[0].mxu0
    %v204 = vadd.f32 %v130, %v203
    %v205 = vpop.f32.mrb[0].mxu0
    %v206 = vadd.f32 %v134, %v205
    %207 = vmatprep.mubr.f32.mxu0 0.0
    %208 = vmatmul.mubr.f32.gmra.mrb[0].mxu0 %v86
    %v209 = vpop.f32.mrb[0].mxu0
    %v210 = vadd.f32 %v130, %v209
    %v211 = vpop.f32.mrb[0].mxu0
    %v212 = vadd.f32 %v134, %v211
    %213 = vmatprep.mubr.f32.mxu0 0.0
    %214 = vmatmul.mubr.f32.gmra.mrb[0].mxu0 %v87
    %v215 = vpop.f32.mrb[0].mxu0
    %v216 = vadd.f32 %v130, %v215
    %v217 = vpop.f32.mrb[0].mxu0
    %v218 = vadd.f32 %v134, %v217
    %219 = vmatprep.mubr.f32.mxu0 0.0
    %220 = vmatmul.mubr.f32.gmra.mrb[0].mxu0 %v88
    %v221 = vpop.f32.mrb[0].mxu0
    %v222 = vadd.f32 %v130, %v221
    %v223 = vpop.f32.mrb[0].mxu0
    %v224 = vadd.f32 %v134, %v223
    %225 = vmatprep.mubr.f32.mxu0 0.0
    %226 = vmatmul.mubr.f32.gmra.mrb[0].mxu0 %v89
    %v227 = vpop.f32.mrb[0].mxu0
    %v228 = vadd.f32 %v130, %v227
    %v229 = vpop.f32.mrb[0].mxu0
    %v230 = vadd.f32 %v134, %v229
    %231 = vmatprep.mubr.f32.mxu0 0.0
    %232 = vmatmul.mubr.f32.gmra.mrb[0].mxu0 %v90
    %v233 = vpop.f32.mrb[0].mxu0
    %v234 = vadd.f32 %v130, %v233
    %v235 = vpop.f32.mrb[0].mxu0
    %v236 = vadd.f32 %v134, %v235
    %237 = vmatprep.mubr.f32.mxu0 0.0
    %238 = vmatmul.mubr.f32.gmra.mrb[0].mxu0 %v91
    %v239 = vpop.f32.mrb[0].mxu0
    %v240 = vadd.f32 %v130, %v239
    %v241 = vpop.f32.mrb[0].mxu0
    %v242 = vadd.f32 %v134, %v241
    %243 = vmatprep.mubr.f32.mxu0 0.0
    %244 = vmatmul.mubr.f32.gmra.mrb[0].mxu0 %v92
    %v245 = vpop.f32.mrb[0].mxu0
    %v246 = vadd.f32 %v130, %v245
    %v247 = vpop.f32.mrb[0].mxu0
    %v248 = vadd.f32 %v134, %v247
    %249 = vdwg.mxu0
    %v250 = vrot.slane %v206, 4
    %v251 = vmax.f32 %v206, %v250
    %v252 = vrot.slane %v251, 2
    %v253 = vmax.f32 %v251, %v252
    %v254 = vrot.slane %v253, 1
    %v255 = vmax.f32 %v253, %v254
    %v256 = vrot.slane %v212, 4
    %v257 = vmax.f32 %v212, %v256
    %v258 = vrot.slane %v257, 2
    %v259 = vmax.f32 %v257, %v258
    %v260 = vrot.slane %v259, 1
    %v261 = vmax.f32 %v259, %v260
    %v262 = vrot.slane %v218, 4
    %v263 = vmax.f32 %v218, %v262
    %v264 = vrot.slane %v263, 2
    %v265 = vmax.f32 %v263, %v264
    %v266 = vrot.slane %v265, 1
    %v267 = vmax.f32 %v265, %v266
    %v268 = vrot.slane %v224, 4
    %v269 = vmax.f32 %v224, %v268
    %v270 = vrot.slane %v269, 2
    %v271 = vmax.f32 %v269, %v270
    %v272 = vrot.slane %v271, 1
    %v273 = vmax.f32 %v271, %v272
    %v274 = vrot.slane %v230, 4
    %v275 = vmax.f32 %v230, %v274
    %v276 = vrot.slane %v275, 2
    %v277 = vmax.f32 %v275, %v276
    %v278 = vrot.slane %v277, 1
    %v279 = vmax.f32 %v277, %v278
    %v280 = vrot.slane %v236, 4
    %v281 = vmax.f32 %v236, %v280
    %v282 = vrot.slane %v281, 2
    %v283 = vmax.f32 %v281, %v282
    %v284 = vrot.slane %v283, 1
    %v285 = vmax.f32 %v283, %v284
    %v286 = vrot.slane %v242, 4
    %v287 = vmax.f32 %v242, %v286
    %v288 = vrot.slane %v287, 2
    %v289 = vmax.f32 %v287, %v288
    %v290 = vrot.slane %v289, 1
    %v291 = vmax.f32 %v289, %v290
    %v292 = vrot.slane %v248, 4
    %v293 = vmax.f32 %v248, %v292
    %v294 = vrot.slane %v293, 2
    %v295 = vmax.f32 %v293, %v294
    %v296 = vrot.slane %v295, 1
    %v297 = vmax.f32 %v295, %v296
    %v298 = vsub.f32 %v206, %v255
    %v299 = vsub.f32 %v212, %v261
    %v300 = vsub.f32 %v218, %v267
    %v301 = vsub.f32 %v224, %v273
    %v302 = vsub.f32 %v230, %v279
    %v303 = vsub.f32 %v236, %v285
    %v304 = vsub.f32 %v242, %v291
    %v305 = vsub.f32 %v248, %v297
    %v306 = vmul.f32 %v298, 1.442695
    %v307 = vpow.pop %v306
    %v308 = vmul.f32 %v299, 1.442695
    %v309 = vpow.pop %v308
    %v310 = vmul.f32 %v300, 1.442695
    %v311 = vpow.pop %v310
    %v312 = vmul.f32 %v301, 1.442695
    %v313 = vpow.pop %v312
    %v314 = vmul.f32 %v302, 1.442695
    %v315 = vpow.pop %v314
    %v316 = vmul.f32 %v303, 1.442695
    %v317 = vpow.pop %v316
    %v318 = vmul.f32 %v304, 1.442695
    %v319 = vpow.pop %v318
    %v320 = vmul.f32 %v305, 1.442695
    %v321 = vpow.pop %v320
    %v322 = vrot.slane %v307, 4
    %v323 = vadd.f32 %v307, %v322
    %v324 = vrot.slane %v323, 2
    %v325 = vadd.f32 %v323, %v324
    %v326 = vrot.slane %v325, 1
    %v327 = vadd.f32 %v325, %v326
    %v328 = vrot.slane %v309, 4
    %v329 = vadd.f32 %v309, %v328
    %v330 = vrot.slane %v329, 2
    %v331 = vadd.f32 %v329, %v330
    %v332 = vrot.slane %v331, 1
    %v333 = vadd.f32 %v331, %v332
    %v334 = vrot.slane %v311, 4
    %v335 = vadd.f32 %v311, %v334
    %v336 = vrot.slane %v335, 2
    %v337 = vadd.f32 %v335, %v336
    %v338 = vrot.slane %v337, 1
    %v339 = vadd.f32 %v337, %v338
    %v340 = vrot.slane %v313, 4
    %v341 = vadd.f32 %v313, %v340
    %v342 = vrot.slane %v341, 2
    %v343 = vadd.f32 %v341, %v342
    %v344 = vrot.slane %v343, 1
    %v345 = vadd.f32 %v343, %v344
    %v346 = vrot.slane %v315, 4
    %v347 = vadd.f32 %v315, %v346
    %v348 = vrot.slane %v347, 2
    %v349 = vadd.f32 %v347, %v348
    %v350 = vrot.slane %v349, 1
    %v351 = vadd.f32 %v349, %v350
    %v352 = vrot.slane %v317, 4
    %v353 = vadd.f32 %v317, %v352
    %v354 = vrot.slane %v353, 2
    %v355 = vadd.f32 %v353, %v354
    %v356 = vrot.slane %v355, 1
    %v357 = vadd.f32 %v355, %v356
    %v358 = vrot.slane %v319, 4
    %v359 = vadd.f32 %v319, %v358
    %v360 = vrot.slane %v359, 2
    %v361 = vadd.f32 %v359, %v360
    %v362 = vrot.slane %v361, 1
    %v363 = vadd.f32 %v361, %v362
    %v364 = vrot.slane %v321, 4
    %v365 = vadd.f32 %v321, %v364
    %v366 = vrot.slane %v365, 2
    %v367 = vadd.f32 %v365, %v366
    %v368 = vrot.slane %v367, 1
    %v369 = vadd.f32 %v367, %v368
    %v370 = vrcp.pop %v327
    %v371 = vrcp.pop %v333
    %v372 = vrcp.pop %v339
    %v373 = vrcp.pop %v345
    %v374 = vrcp.pop %v351
    %v375 = vrcp.pop %v357
    %v376 = vrcp.pop %v363
    %v377 = vrcp.pop %v369
    %v378 = vmul.f32 %v307, %v370
    %v379 = vmul.f32 %v309, %v371
    %v380 = vmul.f32 %v311, %v372
    %v381 = vmul.f32 %v313, %v373
    %v382 = vmul.f32 %v315, %v374
    %v383 = vmul.f32 %v317, %v375
    %v384 = vmul.f32 %v319, %v376
    %v385 = vmul.f32 %v321, %v377
    %v386 = vld [vmem:[%s1] sm:$0x1]
    %v387 = vmul.f32 %v378, %v204
    %v388 = vmul.f32 %v379, %v210
    %v389 = vmul.f32 %v380, %v216
    %v390 = vmul.f32 %v381, %v222
    %v391 = vmul.f32 %v382, %v228
    %v392 = vmul.f32 %v383, %v234
    %v393 = vmul.f32 %v384, %v240
    %v394 = vmul.f32 %v385, %v246
    %v395 = vrot.slane %v387, 4
    %v396 = vadd.f32 %v387, %v395
    %v397 = vrot.slane %v396, 2
    %v398 = vadd.f32 %v396, %v397
    %v399 = vrot.slane %v398, 1
    %v400 = vadd.f32 %v398, %v399
    %v401 = vrot.slane %v388, 4
    %v402 = vadd.f32 %v388, %v401
    %v403 = vrot.slane %v402, 2
    %v404 = vadd.f32 %v402, %v403
    %v405 = vrot.slane %v404, 1
    %v406 = vadd.f32 %v404, %v405
    %v407 = vrot.slane %v389, 4
    %v408 = vadd.f32 %v389, %v407
    %v409 = vrot.slane %v408, 2
    %v410 = vadd.f32 %v408, %v409
    %v411 = vrot.slane %v410, 1
    %v412 = vadd.f32 %v410, %v411
    %v413 = vrot.slane %v390, 4
    %v414 = vadd.f32 %v390, %v413
    %v415 = vrot.slane %v414, 2
    %v416 = vadd.f32 %v414, %v415
    %v417 = vrot.slane %v416, 1
    %v418 = vadd.f32 %v416, %v417
    %v419 = vrot.slane %v391, 4
    %v420 = vadd.f32 %v391, %v419
    %v421 = vrot.slane %v420, 2
    %v422 = vadd.f32 %v420, %v421
    %v423 = vrot.slane %v422, 1
    %v424 = vadd.f32 %v422, %v423
    %v425 = vrot.slane %v392, 4
    %v426 = vadd.f32 %v392, %v425
    %v427 = vrot.slane %v426, 2
    %v428 = vadd.f32 %v426, %v427
    %v429 = vrot.slane %v428, 1
    %v430 = vadd.f32 %v428, %v429
    %v431 = vrot.slane %v393, 4
    %v432 = vadd.f32 %v393, %v431
    %v433 = vrot.slane %v432, 2
    %v434 = vadd.f32 %v432, %v433
    %v435 = vrot.slane %v434, 1
    %v436 = vadd.f32 %v434, %v435
    %v437 = vrot.slane %v394, 4
    %v438 = vadd.f32 %v394, %v437
    %v439 = vrot.slane %v438, 2
    %v440 = vadd.f32 %v438, %v439
    %v441 = vrot.slane %v440, 1
    %v442 = vadd.f32 %v440, %v441
    %v444 = vlaneseq
    %v445 = vshrl.u32 %v444, 7
    %v446 = vsub.s32 0, %v445
    %v447 = vrot.slane %v386, %v446
    %vm457 = vcmask 1041409
    %v458 = vsel %vm457, %v406, %v400
    %vm459 = vcmask 1042434
    %v460 = vsel %vm459, %v412, %v458
    %vm461 = vcmask 1043459
    %v462 = vsel %vm461, %v418, %v460
    %vm463 = vcmask 1044484
    %v464 = vsel %vm463, %v424, %v462
    %vm465 = vcmask 1045509
    %v466 = vsel %vm465, %v430, %v464
    %vm467 = vcmask 1046534
    %v468 = vsel %vm467, %v436, %v466
    %vm469 = vcmask 1047559
    %v470 = vsel %vm469, %v442, %v468
    %v472 = vadd.f32 %v447, %v470
    %v473 = vld [vmem:[#allocation7] sm:$0xff]
    %v474 = vld [vmem:[#allocation7 + $0x8] sm:$0xff]
    %v475 = vld [vmem:[#allocation7 + $0x10] sm:$0xff]
    %v476 = vld [vmem:[#allocation7 + $0x18] sm:$0xff]
    %v477 = vld [vmem:[#allocation7 + $0x20] sm:$0xff]
    %v478 = vld [vmem:[#allocation7 + $0x28] sm:$0xff]
    %v479 = vld [vmem:[#allocation7 + $0x30] sm:$0xff]
    %v480 = vld [vmem:[#allocation7 + $0x38] sm:$0xff]
    %v481 = vld [vmem:[#allocation7 + $0x40] sm:$0xff]
    %v482 = vld [vmem:[#allocation7 + $0x48] sm:$0xff]
    %v483 = vld [vmem:[#allocation7 + $0x50] sm:$0xff]
    %v484 = vld [vmem:[#allocation7 + $0x58] sm:$0xff]
    %v485 = vld [vmem:[#allocation7 + $0x60] sm:$0xff]
    %v486 = vld [vmem:[#allocation7 + $0x68] sm:$0xff]
    %v487 = vld [vmem:[#allocation7 + $0x70] sm:$0xff]
    %v488 = vld [vmem:[#allocation7 + $0x78] sm:$0xff]
    %v489 = vld [vmem:[%s5] sm:$0x1]
    %v491 = vlaneseq
    %v492 = vshrl.u32 %v491, 7
    %v493 = vsub.s32 0, %v492
    %v494 = vrot.slane %v489, %v493
    %496 = vmatprep.subr.mxu0 0.0
    %497 = vmatpush1.msra.mxu0 %v473
    %498 = vmatprep.subr.mxu0 0.0
    %499 = vmatpush1.msra.mxu0 %v474
    %500 = vmatprep.subr.mxu0 0.0
    %501 = vmatpush1.msra.mxu0 %v475
    %502 = vmatprep.subr.mxu0 0.0
    %503 = vmatpush1.msra.mxu0 %v476
    %504 = vmatprep.subr.mxu0 0.0
    %505 = vmatpush1.msra.mxu0 %v477
    %506 = vmatprep.subr.mxu0 0.0
    %507 = vmatpush1.msra.mxu0 %v478
    %508 = vmatprep.subr.mxu0 0.0
    %509 = vmatpush1.msra.mxu0 %v479
    %510 = vmatprep.subr.mxu0 0.0
    %511 = vmatpush1.msra.mxu0 %v480
    %512 = vmatprep.subr.mxu0 0.0
    %513 = vmatpush1.msra.mxu0 %v481
    %514 = vmatprep.subr.mxu0 0.0
    %515 = vmatpush1.msra.mxu0 %v482
    %516 = vmatprep.subr.mxu0 0.0
    %517 = vmatpush1.msra.mxu0 %v483
    %518 = vmatprep.subr.mxu0 0.0
    %519 = vmatpush1.msra.mxu0 %v484
    %520 = vmatprep.subr.mxu0 0.0
    %521 = vmatpush1.msra.mxu0 %v485
    %522 = vmatprep.subr.mxu0 0.0
    %523 = vmatpush1.msra.mxu0 %v486
    %524 = vmatprep.subr.mxu0 0.0
    %525 = vmatpush1.msra.mxu0 %v487
    %526 = vmatprep.subr.mxu0 0.0
    %527 = vmatpush1.msra.mxu0 %v488
    %528 = vmatprep.subr.mxu0 0.0
    %529 = vmatpush1.msra.mxu0 0.0
    %530 = vmatprep.subr.mxu0 0.0
    %531 = vmatpush1.msra.mxu0 0.0
    %532 = vmatprep.subr.mxu0 0.0
    %533 = vmatpush1.msra.mxu0 0.0
    %534 = vmatprep.subr.mxu0 0.0
    %535 = vmatpush1.msra.mxu0 0.0
    %536 = vmatprep.subr.mxu0 0.0
    %537 = vmatpush1.msra.mxu0 0.0
    %538 = vmatprep.subr.mxu0 0.0
    %539 = vmatpush1.msra.mxu0 0.0
    %540 = vmatprep.subr.mxu0 0.0
    %541 = vmatpush1.msra.mxu0 0.0
    %542 = vmatprep.subr.mxu0 0.0
    %543 = vmatpush1.msra.mxu0 0.0
    %544 = vmatprep.subr.mxu0 0.0
    %545 = vmatpush1.msra.mxu0 0.0
    %546 = vmatprep.subr.mxu0 0.0
    %547 = vmatpush1.msra.mxu0 0.0
    %548 = vmatprep.subr.mxu0 0.0
    %549 = vmatpush1.msra.mxu0 0.0
    %550 = vmatprep.subr.mxu0 0.0
    %551 = vmatpush1.msra.mxu0 0.0
    %552 = vmatprep.subr.mxu0 0.0
    %553 = vmatpush1.msra.mxu0 0.0
    %554 = vmatprep.subr.mxu0 0.0
    %555 = vmatpush1.msra.mxu0 0.0
    %556 = vmatprep.subr.mxu0 0.0
    %557 = vmatpush1.msra.mxu0 0.0
    %558 = vmatprep.subr.mxu0 0.0
    %559 = vmatpush1.msra.mxu0 0.0
    %560 = vmatprep.mubr.f32.mxu0 0.0
    %561 = vmatmul.mubr.f32.gmra.mrb[0].mxu0 %v472
    %v562 = vpop.f32.mrb[0].mxu0
    %v563 = vadd.f32 %v494, %v562
    %v564 = vpop.f32.mrb[0].mxu0
    %565 = vdwg.mxu0
    %v566 = vmax.f32 %v563, 0.0
    %v567 = vadd.f32 %v472, %v566
    %v568 = vld [vmem:[#allocation8] sm:$0xff]
    %v569 = vld [vmem:[#allocation8 + $0x8] sm:$0xff]
    %v570 = vld [vmem:[#allocation8 + $0x10] sm:$0xff]
    %v571 = vld [vmem:[#allocation8 + $0x18] sm:$0xff]
    %v572 = vld [vmem:[#allocation8 + $0x20] sm:$0xff]
    %v573 = vld [vmem:[#allocation8 + $0x28] sm:$0xff]
    %v574 = vld [vmem:[#allocation8 + $0x30] sm:$0xff]
    %v575 = vld [vmem:[#allocation8 + $0x38] sm:$0xff]
    %v576 = vld [vmem:[#allocation8 + $0x40] sm:$0xff]
    %v577 = vld [vmem:[#allocation8 + $0x48] sm:$0xff]
    %v578 = vld [vmem:[#allocation8 + $0x50] sm:$0xff]
    %v579 = vld [vmem:[#allocation8 + $0x58] sm:$0xff]
    %v580 = vld [vmem:[#allocation8 + $0x60] sm:$0xff]
    %v581 = vld [vmem:[#allocation8 + $0x68] sm:$0xff]
    %v582 = vld [vmem:[#allocation8 + $0x70] sm:$0xff]
    %v583 = vld [vmem:[#allocation8 + $0x78] sm:$0xff]
    %v584 = vld [vmem:[%s7] sm:$0x1]
    %v586 = vlaneseq
    %v587 = vshrl.u32 %v586, 7
    %v588 = vsub.s32 0, %v587
    %v589 = vrot.slane %v584, %v588
    %591 = vmatprep.subr.mxu0 0.0
    %592 = vmatpush1.msra.mxu0 %v568
    %593 = vmatprep.subr.mxu0 0.0
    %594 = vmatpush1.msra.mxu0 %v569
    %595 = vmatprep.subr.mxu0 0.0
    %596 = vmatpush1.msra.mxu0 %v570
    %597 = vmatprep.subr.mxu0 0.0
    %598 = vmatpush1.msra.mxu0 %v571
    %599 = vmatprep.subr.mxu0 0.0
    %600 = vmatpush1.msra.mxu0 %v572
    %601 = vmatprep.subr.mxu0 0.0
    %602 = vmatpush1.msra.mxu0 %v573
    %603 = vmatprep.subr.mxu0 0.0
    %604 = vmatpush1.msra.mxu0 %v574
    %605 = vmatprep.subr.mxu0 0.0
    %606 = vmatpush1.msra.mxu0 %v575
    %607 = vmatprep.subr.mxu0 0.0
    %608 = vmatpush1.msra.mxu0 %v576
    %609 = vmatprep.subr.mxu0 0.0
    %610 = vmatpush1.msra.mxu0 %v577
    %611 = vmatprep.subr.mxu0 0.0
    %612 = vmatpush1.msra.mxu0 %v578
    %613 = vmatprep.subr.mxu0 0.0
    %614 = vmatpush1.msra.mxu0 %v579
    %615 = vmatprep.subr.mxu0 0.0
    %616 = vmatpush1.msra.mxu0 %v580
    %617 = vmatprep.subr.mxu0 0.0
    %618 = vmatpush1.msra.mxu0 %v581
    %619 = vmatprep.subr.mxu0 0.0
    %620 = vmatpush1.msra.mxu0 %v582
    %621 = vmatprep.subr.mxu0 0.0
    %622 = vmatpush1.msra.mxu0 %v583
    %623 = vmatprep.subr.mxu0 0.0
    %624 = vmatpush1.msra.mxu0 0.0
    %625 = vmatprep.subr.mxu0 0.0
    %626 = vmatpush1.msra.mxu0 0.0
    %627 = vmatprep.subr.mxu0 0.0
    %628 = vmatpush1.msra.mxu0 0.0
    %629 = vmatprep.subr.mxu0 0.0
    %630 = vmatpush1.msra.mxu0 0.0
    %631 = vmatprep.subr.mxu0 0.0
    %632 = vmatpush1.msra.mxu0 0.0
    %633 = vmatprep.subr.mxu0 0.0
    %634 = vmatpush1.msra.mxu0 0.0
    %635 = vmatprep.subr.mxu0 0.0
    %636 = vmatpush1.msra.mxu0 0.0
    %637 = vmatprep.subr.mxu0 0.0
    %638 = vmatpush1.msra.mxu0 0.0
    %639 = vmatprep.subr.mxu0 0.0
    %640 = vmatpush1.msra.mxu0 0.0
    %641 = vmatprep.subr.mxu0 0.0
    %642 = vmatpush1.msra.mxu0 0.0
    %643 = vmatprep.subr.mxu0 0.0
    %644 = vmatpush1.msra.mxu0 0.0
    %645 = vmatprep.subr.mxu0 0.0
    %646 = vmatpush1.msra.mxu0 0.0
    %647 = vmatprep.subr.mxu0 0.0
    %648 = vmatpush1.msra.mxu0 0.0
    %649 = vmatprep.subr.mxu0 0.0
    %650 = vmatpush1.msra.mxu0 0.0
    %651 = vmatprep.subr.mxu0 0.0
    %652 = vmatpush1.msra.mxu0 0.0
    %653 = vmatprep.subr.mxu0 0.0
    %654 = vmatpush1.msra.mxu0 0.0
    %655 = vmatprep.mubr.f32.mxu0 0.0
    %656 = vmatmul.mubr.f32.gmra.mrb[0].mxu0 %v567
    %v657 = vpop.f32.mrb[0].mxu0
    %v658 = vadd.f32 %v589, %v657
    %v659 = vpop.f32.mrb[0].mxu0
    %660 = vdwg.mxu0
    %661 = vst [vmem:[#allocation10] sm:$0xff] %v658
    // Predicated region
    $region50: #{tpu_custom_call.1} parent=1 // pred_check
      _
    $region51: #{tpu_custom_call.1} parent=1 // pred_check_branch
      %663 = sbr.rel (0) target = $region53
    $region52: #{tpu_custom_call.1} parent=1 // pred_region
      %s665 = ssub.s32 128, 128
      %666 = vsyncadd [#allocation4], %s665
      %s668 = sshll.u32 [#allocation10], 4
      %s669 = int_to_ptr.vmem [resolvable:$true] %s668
      %671 = dma.vmem_to_hbm [thread:$0]  %s669, 128, %s8, [#allocation4]
    $region53: #{tpu_custom_call.1} parent=1 // pred_fallthru
      _
    // Predicated region
    $region54: #{tpu_custom_call.1} parent=1 // pred_check
      _
    $region55: #{tpu_custom_call.1} parent=1 // pred_check_branch
      %673 = sbr.rel (0) target = $region57
    $region56: #{tpu_custom_call.1} parent=1 // pred_region
      %674 = dma.done [#allocation4], 128
    $region57: #{tpu_custom_call.1} parent=1 // pred_fallthru
      _
    %675 = vsyncpa [#allocation3], 1
    %676 = vsyncpa [#allocation6], 1
    %677 = vsyncpa [#allocation9], 1
    %678 = vsyncpa [#allocation4], 1

</llo_original>
